<compile_context>
chip_gen: v7x
topology: tpu7x:2x2x1
jax: 0.10.0
libtpu: 0.0.40
codegen_flags: <defaults>
</compile_context>

<pallas_src>
import jax
import jax.numpy as jnp
from jax import lax
from jax.experimental import pallas as pl
from jax.experimental.pallas import tpu as pltpu


def _round_up(x, m):
    return ((x + m - 1) // m) * m


def _vmem_caps():
    """Returns (vmem_limit_bytes handed to Mosaic, byte budget for tile sizing)."""
    try:
        cap = int(pltpu.get_tpu_info().vmem_capacity_bytes)
    except Exception:
        cap = 64 << 20  # conservative fallback: v7x per-TensorCore VMEM
    # Give Mosaic 3/4 of physical VMEM, but size our own tiles against 1/2 so
    # double-buffers + compiler-internal scratch never overshoot the limit.
    return int(cap * 0.75), int(cap * 0.5)


def _choose_tm(N, D, C_pad, x_bpe, w_bpe, out_bpe, vmem_budget):
    """Token-tile size along the per-image sequence axis N.

    Largest multiple of 128 whose *double-buffered* footprint (activation tile,
    output tile, and the resident-but-still-double-buffered weight/bias) fits
    the budget; capped so the N axis gets multiple grid steps (megacore).
    """
    if N <= 128:
        return N  # full-axis block; (8,128) rule satisfied via full-dim exception

    def footprint(tm):
        return (2 * tm * D * x_bpe          # streamed activation tile (x2 buffers)
                + 2 * tm * C_pad * out_bpe  # streamed output tile     (x2 buffers)
                + 2 * C_pad * D * w_bpe     # weight: constant index map but still
                + 2 * C_pad * 4)            # double-buffered by default; bias f32

    tm = 4096
    while tm > 128 and footprint(tm) > vmem_budget:
        tm //= 2
    tm = max(tm, 128)
    # Keep >=2 (ideally 4) grid steps along N so both v7x TensorCores get work.
    target_steps = 4 if N >= 4 * 128 else 2
    tm = min(tm, _round_up(pl.cdiv(N, target_steps), 128))
    return min(tm, _round_up(N, 128))


def _decoder_head_kernel(x_ref, w_ref, b_ref, o_ref):
    # x_ref: (TM, D)   activations (bf16 or f32)
    # w_ref: (C_pad, D) weight in PyTorch (out, in) layout
    # b_ref: (C_pad, 1) bias, f32
    # o_ref: (TM-minor) output tile (C_pad, TM) -> channels-first fused here
    acc = lax.dot_general(
        w_ref[...], x_ref[...],
        dimension_numbers=(((1,), (1,)), ((), ())),  # 'cd,md->cm'
        preferred_element_type=jnp.float32,
    )
    o_ref[...] = (acc + b_ref[...]).astype(o_ref.dtype)


def decoder_linear_head(x_tokens, weight_cd, bias_c1, *, n_valid=None,
                        out_dtype=jnp.float32):
    """Fused linear head + channels-first rearrange.

    x_tokens : (B, N, D)      activations (f32 or bf16)
    weight_cd: (C_pad, D)     lane-dense padded weight, (out, in) layout
    bias_c1  : (C_pad, 1)     padded bias, f32
    returns  : (B, C_pad, N)  f32 logits, channels-first (transpose fused in)
    """
    B, N, D = x_tokens.shape
    C_pad = weight_cd.shape[0]

    vmem_limit, vmem_budget = _vmem_caps()
    TM = _choose_tm(
        N, D, C_pad,
        x_bpe=x_tokens.dtype.itemsize,
        w_bpe=weight_cd.dtype.itemsize,
        out_bpe=jnp.dtype(out_dtype).itemsize,
        vmem_budget=vmem_budget,
    )
    grid = (B, pl.cdiv(N, TM))

    cost = pl.CostEstimate(
        flops=2 * B * N * D * (n_valid if n_valid is not None else C_pad),
        transcendentals=0,
        bytes_accessed=(B * N * D * x_tokens.dtype.itemsize
                        + C_pad * D * weight_cd.dtype.itemsize
                        + B * C_pad * N * jnp.dtype(out_dtype).itemsize),
    )

    return pl.pallas_call(
        _decoder_head_kernel,
        out_shape=jax.ShapeDtypeStruct((B, C_pad, N), out_dtype),
        grid_spec=pl.GridSpec(
            grid=grid,
            in_specs=[
                pl.BlockSpec((None, TM, D), lambda b, i: (b, i, 0)),  # streamed tokens
                pl.BlockSpec((C_pad, D), lambda b, i: (0, 0)),        # resident weight
                pl.BlockSpec((C_pad, 1), lambda b, i: (0, 0)),        # resident bias
            ],
            out_specs=pl.BlockSpec((None, C_pad, TM), lambda b, i: (b, 0, i)),
        ),
        compiler_params=pltpu.CompilerParams(
            dimension_semantics=("parallel", "parallel"),
            vmem_limit_bytes=vmem_limit,
        ),
        cost_estimate=cost,
    )(x_tokens, weight_cd, bias_c1)


class DecoderLinearPallas:
    """JAX/Pallas port of segm's DecoderLinear (Linear head + NCHW rearrange)."""

    def __init__(self, n_cls, patch_size, d_encoder, key, *, use_bf16=True):
        self.n_cls = n_cls
        self.patch_size = patch_size
        self.d_encoder = d_encoder
        self.compute_dtype = jnp.bfloat16 if use_bf16 else jnp.float32

        # init_weights: trunc_normal(std=0.02) weight, zero bias. PyTorch layout (out, in).
        w = 0.02 * jax.random.truncated_normal(
            key, -2.0, 2.0, (n_cls, d_encoder), dtype=jnp.float32)
        b = jnp.zeros((n_cls,), jnp.float32)
        self.weight = w  # (n_cls, d_encoder) f32 master copy
        self.bias = b

        # Pre-pad once to a lane-dense channel count; pre-cast the matmul dtype.
        self.c_pad = _round_up(max(n_cls, 1), 128)
        w_pad = jnp.pad(w, ((0, self.c_pad - n_cls), (0, 0)))
        self.w_pad = w_pad.astype(self.compute_dtype)                      # (C_pad, D)
        self.b_pad = jnp.pad(b, (0, self.c_pad - n_cls)).reshape(self.c_pad, 1)  # f32

    def __call__(self, x, im_size):
        H, W = im_size
        GS = H // self.patch_size
        B, N, D = x.shape
        assert D == self.d_encoder
        WS = N // GS
        assert GS * WS == N, "token count must equal (H//p) * (W//p)"
        assert WS == W // self.patch_size, "non-square grid mismatch"

        y = decoder_linear_head(
            x.astype(self.compute_dtype), self.w_pad, self.b_pad, n_valid=self.n_cls
        )  # (B, C_pad, N) f32, channels-first already
        # Slice off channel padding; reshape to NCHW grid is layout-free.
        return y[:, : self.n_cls, :].reshape(B, self.n_cls, GS, WS)


if __name__ == "__main__":
    key = jax.random.PRNGKey(0)
    k_param, k_x = jax.random.split(key)

    # Small shapes: image 16x16, patch 4 -> 4x4 = 16 tokens, d_encoder=32, 8 classes.
    B, H, W = 2, 16, 16
    patch_size = 4
    d_encoder = 32
    n_cls = 8
    GS = H // patch_size
    WS = W // patch_size
    N = GS * WS

    decoder = DecoderLinearPallas(n_cls, patch_size, d_encoder, k_param)  # bf16 matmul
    x = jax.random.normal(k_x, (B, N, d_encoder), dtype=jnp.float32)

    out = jax.block_until_ready(decoder(x, (H, W)))
    assert out.shape == (B, n_cls, GS, WS)

    # Reference matching the kernel's bf16-operand / f32-accumulate numerics.
    ref_bnc = (jnp.dot(x.astype(jnp.bfloat16).reshape(B * N, d_encoder),
                       decoder.weight.astype(jnp.bfloat16).T,
                       preferred_element_type=jnp.float32)
               + decoder.bias)
    ref = jnp.transpose(ref_bnc.reshape(B, GS, WS, n_cls), (0, 3, 1, 2))
    assert jnp.allclose(out, ref, atol=1e-3, rtol=1e-3), float(jnp.max(jnp.abs(out - ref)))

    # Loose sanity check against the pure-f32 PyTorch-equivalent reference.
    ref_f32 = jnp.transpose(
        (jnp.einsum("bnd,cd->bnc", x, decoder.weight) + decoder.bias
         ).reshape(B, GS, WS, n_cls),
        (0, 3, 1, 2))
    assert jnp.allclose(out, ref_f32, atol=5e-2, rtol=5e-2)

    print("KERNEL_OK")
</pallas_src>

<mosaic_0001>
module attributes {stable_mosaic.version = 11 : i64} {
  func.func @_decoder_head_kernel(%arg0: i32, %arg1: i32, %arg2: memref<1x16x32xbf16, #tpu.memory_space<vmem>>, %arg3: memref<128x32xbf16, #tpu.memory_space<vmem>>, %arg4: memref<128x1xf32, #tpu.memory_space<vmem>>, %arg5: memref<1x128x16xf32, #tpu.memory_space<vmem>>) attributes {dimension_semantics = [#tpu.dimension_semantics<parallel>, #tpu.dimension_semantics<parallel>], iteration_bounds = array<i64: 2, 1>, scalar_prefetch = 0 : i64, scratch_operands = 0 : i64, tpu.core_type = #tpu.core_type<tc>, window_params = [{transform_indices = @transform_0, window_bounds = array<i64: 1, 16, 32>}, {pipeline_mode = #tpu.pipeline_mode<synchronous>, transform_indices = @transform_1, window_bounds = array<i64: 128, 32>}, {pipeline_mode = #tpu.pipeline_mode<synchronous>, transform_indices = @transform_2, window_bounds = array<i64: 128, 1>}, {transform_indices = @transform_3, window_bounds = array<i64: 1, 128, 16>}]} {
    %c0 = arith.constant 0 : index
    %c0_0 = arith.constant 0 : index
    %0 = vector.load %arg3[%c0, %c0_0] : memref<128x32xbf16, #tpu.memory_space<vmem>>, vector<128x32xbf16>
    %c0_1 = arith.constant 0 : index
    %c0_2 = arith.constant 0 : index
    %c0_3 = arith.constant 0 : index
    %1 = vector.load %arg2[%c0_1, %c0_2, %c0_3] : memref<1x16x32xbf16, #tpu.memory_space<vmem>>, vector<1x16x32xbf16>
    %2 = vector.shape_cast %1 : vector<1x16x32xbf16> to vector<16x32xbf16>
    %cst = arith.constant dense<0.000000e+00> : vector<128x16xf32>
    %3 = tpu.matmul %0, %2, %cst {dimension_numbers = #tpu.dot_dimension_numbers<[1], [1], [0], [0], [0, 0, 1, 0], [], []>} : vector<128x32xbf16>, vector<16x32xbf16>, vector<128x16xf32> -> vector<128x16xf32>
    %c0_4 = arith.constant 0 : index
    %c0_5 = arith.constant 0 : index
    %4 = vector.load %arg4[%c0_4, %c0_5] : memref<128x1xf32, #tpu.memory_space<vmem>>, vector<128x1xf32>
    %5 = vector.broadcast %4 : vector<128x1xf32> to vector<128x16xf32>
    %6 = arith.addf %3, %5 : vector<128x16xf32>
    %c0_6 = arith.constant 0 : index
    %c0_7 = arith.constant 0 : index
    %c0_8 = arith.constant 0 : index
    %7 = vector.load %arg5[%c0_6, %c0_7, %c0_8] : memref<1x128x16xf32, #tpu.memory_space<vmem>>, vector<1x128x16xf32>
    %8 = vector.shape_cast %7 : vector<1x128x16xf32> to vector<128x16xf32>
    %9 = vector.shape_cast %6 : vector<128x16xf32> to vector<1x128x16xf32>
    tpu.vector_store %arg5[%c0_6, %c0_7, %c0_8], %9 {strides = array<i32>} : memref<1x128x16xf32, #tpu.memory_space<vmem>>, vector<1x128x16xf32>,
    return
  }
  func.func @transform_0(%arg0: i32, %arg1: i32) -> (i32, i32, i32) {
    %c0_i32 = arith.constant 0 : i32
    %c0_i32_0 = arith.constant 0 : i32
    return %arg0, %arg1, %c0_i32 : i32, i32, i32
  }
  func.func @transform_1(%arg0: i32, %arg1: i32) -> (i32, i32) {
    %c0_i32 = arith.constant 0 : i32
    %c0_i32_0 = arith.constant 0 : i32
    %c0_i32_1 = arith.constant 0 : i32
    return %c0_i32, %c0_i32_0 : i32, i32
  }
  func.func @transform_2(%arg0: i32, %arg1: i32) -> (i32, i32) {
    %c0_i32 = arith.constant 0 : i32
    %c0_i32_0 = arith.constant 0 : i32
    %c0_i32_1 = arith.constant 0 : i32
    return %c0_i32, %c0_i32_0 : i32, i32
  }
  func.func @transform_3(%arg0: i32, %arg1: i32) -> (i32, i32, i32) {
    %c0_i32 = arith.constant 0 : i32
    %c0_i32_0 = arith.constant 0 : i32
    return %arg0, %c0_i32, %arg1 : i32, i32, i32
  }
}

</mosaic_0001>

<llo_original>
// kernel: tpu_custom_call.1
$region0: #{tpu_custom_call.1}
  #allocation0 [shape = 'u32[]', space=smem, size = 0x4, offset = 0x4, fixed_abs, tag = 'smem constant byte address 0x4 - core index']
  #allocation1 [shape = 'u32[144,128]{1,0:T(1,128)}', space=vmem, size = 0x12000, scoped, tag = 'internal scratch']
  %s0 = inlined_call_operand.vmem [shape: bf16[2,16,32], index: 0, kind: input, shape index: {}]
  %s1 = inlined_call_operand.vmem [shape: bf16[128,32], index: 1, kind: input, shape index: {}]
  %s2 = inlined_call_operand.vmem [shape: f32[128,1], index: 2, kind: input, shape index: {}]
  %s3 = inlined_call_operand.vmem [shape: f32[2,128,16], index: 3, kind: output, shape index: {}]
  %s4 = sld [smem:[#allocation0]]
  $region45: #{tpu_custom_call.1} parent=0
    _
  %s6 = ssub.s32 1, %s4
  %s7 = scalar_select 0, %s6, %s4
  loop: start=0, step=1, limit=4
  $region2: #{tpu_custom_call.1} parent=0 // loop_pre_header
    _
  $region3: #{tpu_custom_call.1} parent=0 // loop_header
    %s9 = sphi 0, %s13
    %p10 = scmp.ge.s32.totalorder %s9, 4
    %s16 = sphi 0, %s28
    %s17 = sphi 0, %s24
    %s18 = sphi 0, %s16
    %s19 = sphi 0, %s17
    %s20 = sphi 0, %s18
    %s21 = sphi 0, %s19
    %s33 = sphi 0, %s35
    %s36 = sphi 0, %s33
    %s37 = sphi 0, %s36
    %s53 = sphi 0, %s37
    %s57 = sphi 0, %s57
    %s59 = sphi 0, %s57
    %s60 = sphi 0, %s59
    %s74 = sphi 0, %s60
    %s78 = sphi 0, %s78
    %s80 = sphi 0, %s78
    %s81 = sphi 0, %s80
    %s95 = sphi 0, %s81
    %s103 = sphi 0, %s105
    %s106 = sphi 0, %s103
    %s107 = sphi 0, %s106
    %s123 = sphi 0, %s107
  $region4: #{tpu_custom_call.1} parent=0 // loop_header_branch
    %12 = sbr.rel (%p10) target = $region8
  $region5: #{tpu_custom_call.1} parent=0 // loop_body
    %s14 = ssub.s32 %s9, 1
    %s15 = ssub.s32 %s9, 2
    %s22 = sadd.s32 1, %s17
    %p23 = scmp.ge.s32.totalorder %s22, 1
    %s24 = scalar_select %p23, 0, %s22
    %s25 = sadd.s32 1, %s16
    %s26 = scalar_select %p23, %s25, %s16
    %p27 = scmp.ge.s32.totalorder %s26, 2
    %s28 = scalar_select %p27, 0, %s26
    %s29 = ssub.s32 %s16, %s28
    %s30 = ssub.s32 %s17, %s24
    %s31 = sor.u32 %s29, %s30
    %p32 = scmp.eq.s32.totalorder %s31, 0
    %s34 = sadd.s32 %s33, 1
    %s35 = scalar_select %p32, %s33, %s34
    %p38 = pneg %p32
    %p39 = scmp.eq.s32.totalorder %s9, 1
    %p40 = por %p38, %p39
    %p41 = scmp.ne.s32.totalorder %s33, %s36
    %p42 = scmp.eq.s32.totalorder %s9, 0
    %p43 = por %p41, %p42
    %p44 = scmp.ne.s32.totalorder %s33, %s36
    %p45 = scmp.eq.s32.totalorder %s14, 1
    %p46 = por %p44, %p45
    %p47 = scmp.ne.s32.totalorder %s36, %s37
    %p48 = scmp.eq.s32.totalorder %s14, 0
    %p49 = por %p47, %p48
    %p50 = scmp.ne.s32.totalorder %s36, %s37
    %p51 = scmp.eq.s32.totalorder %s15, 1
    %p52 = por %p50, %p51
    %p54 = scmp.ne.s32.totalorder %s37, %s53
    %p55 = scmp.eq.s32.totalorder %s15, 0
    %p56 = por %p54, %p55
    %s58 = sadd.s32 %s57, 1
    %p61 = scmp.eq.s32.totalorder %s9, 1
    %p62 = scmp.ne.s32.totalorder %s57, %s59
    %p63 = scmp.eq.s32.totalorder %s9, 0
    %p64 = por %p62, %p63
    %p65 = scmp.ne.s32.totalorder %s57, %s59
    %p66 = scmp.eq.s32.totalorder %s14, 1
    %p67 = por %p65, %p66
    %p68 = scmp.ne.s32.totalorder %s59, %s60
    %p69 = scmp.eq.s32.totalorder %s14, 0
    %p70 = por %p68, %p69
    %p71 = scmp.ne.s32.totalorder %s59, %s60
    %p72 = scmp.eq.s32.totalorder %s15, 1
    %p73 = por %p71, %p72
    %p75 = scmp.ne.s32.totalorder %s60, %s74
    %p76 = scmp.eq.s32.totalorder %s15, 0
    %p77 = por %p75, %p76
    %s79 = sadd.s32 %s78, 1
    %p82 = scmp.eq.s32.totalorder %s9, 1
    %p83 = scmp.ne.s32.totalorder %s78, %s80
    %p84 = scmp.eq.s32.totalorder %s9, 0
    %p85 = por %p83, %p84
    %p86 = scmp.ne.s32.totalorder %s78, %s80
    %p87 = scmp.eq.s32.totalorder %s14, 1
    %p88 = por %p86, %p87
    %p89 = scmp.ne.s32.totalorder %s80, %s81
    %p90 = scmp.eq.s32.totalorder %s14, 0
    %p91 = por %p89, %p90
    %p92 = scmp.ne.s32.totalorder %s80, %s81
    %p93 = scmp.eq.s32.totalorder %s15, 1
    %p94 = por %p92, %p93
    %p96 = scmp.ne.s32.totalorder %s81, %s95
    %p97 = scmp.eq.s32.totalorder %s15, 0
    %p98 = por %p96, %p97
    %s99 = ssub.s32 %s16, %s28
    %s100 = ssub.s32 %s17, %s24
    %s101 = sor.u32 %s99, %s100
    %p102 = scmp.eq.s32.totalorder %s101, 0
    %s104 = sadd.s32 %s103, 1
    %s105 = scalar_select %p102, %s103, %s104
    %p108 = pneg %p102
    %p109 = scmp.eq.s32.totalorder %s9, 1
    %p110 = por %p108, %p109
    %p111 = scmp.ne.s32.totalorder %s103, %s106
    %p112 = scmp.eq.s32.totalorder %s9, 0
    %p113 = por %p111, %p112
    %p114 = scmp.ne.s32.totalorder %s103, %s106
    %p115 = scmp.eq.s32.totalorder %s14, 1
    %p116 = por %p114, %p115
    %p117 = scmp.ne.s32.totalorder %s106, %s107
    %p118 = scmp.eq.s32.totalorder %s14, 0
    %p119 = por %p117, %p118
    %p120 = scmp.ne.s32.totalorder %s106, %s107
    %p121 = scmp.eq.s32.totalorder %s15, 1
    %p122 = por %p120, %p121
    %p124 = scmp.ne.s32.totalorder %s107, %s123
    %p125 = scmp.eq.s32.totalorder %s15, 0
    %p126 = por %p124, %p125
    %p127 = scmp.le.s32.totalorder 1, %s9
    %p128 = scmp.lt.s32.totalorder %s9, 3
    %p129 = pnand %p127, %p128
    %p130 = pneg %p129
    // Predicated region
    $region9: #{tpu_custom_call.1} parent=5 // pred_check
      _
    $region10: #{tpu_custom_call.1} parent=5 // pred_check_branch
      %132 = sbr.rel (%p129) target = $region12
    $region11: #{tpu_custom_call.1} parent=5 // pred_region
      %s133 = ssub.s32 %s9, 1
      // Predicated region
      $region13: #{tpu_custom_call.1} parent=11 // pred_check
        %p134 = pneg %p70
      $region14: #{tpu_custom_call.1} parent=11 // pred_check_branch
        %136 = sbr.rel (%p134) target = $region16
      $region15: #{tpu_custom_call.1} parent=11 // pred_region
        _
      $region16: #{tpu_custom_call.1} parent=11 // pred_fallthru
        _
      // Predicated region
      $region17: #{tpu_custom_call.1} parent=11 // pred_check
        %p137 = pneg %p91
      $region18: #{tpu_custom_call.1} parent=11 // pred_check_branch
        %139 = sbr.rel (%p137) target = $region20
      $region19: #{tpu_custom_call.1} parent=11 // pred_region
        _
      $region20: #{tpu_custom_call.1} parent=11 // pred_fallthru
        _
    $region12: #{tpu_custom_call.1} parent=5 // pred_fallthru
      _
    %p140 = scmp.lt.s32.totalorder %s9, 2
    // Predicated region
    $region21: #{tpu_custom_call.1} parent=5 // pred_check
      %p141 = pneg %p140
    $region22: #{tpu_custom_call.1} parent=5 // pred_check_branch
      %143 = sbr.rel (%p141) target = $region24
    $region23: #{tpu_custom_call.1} parent=5 // pred_region
      // Predicated region
      $region25: #{tpu_custom_call.1} parent=23 // pred_check
        %p144 = pneg %p43
      $region26: #{tpu_custom_call.1} parent=23 // pred_check_branch
        %146 = sbr.rel (%p144) target = $region28
      $region27: #{tpu_custom_call.1} parent=23 // pred_region
        %s147 = smul.u32 2, %s17
        %p148 = scmp.lt.s32.totalorder %s16, 1
        %s149 = scalar_select %p148, %s16, 1
        %p150 = scmp.lt.s32.totalorder %s147, 1
        %s151 = scalar_select %p150, %s147, 1
        %s152 = smul.addr %s149, 2
        %s153 = sadd.s32 %s151, %s152
        %s154 = smul.addr %s153, 4
        %s155 = scalar_lea.vmem %s0, %s154
        %s156 = smul.u32 2, %s17
      $region28: #{tpu_custom_call.1} parent=23 // pred_fallthru
        _
    $region24: #{tpu_custom_call.1} parent=5 // pred_fallthru
      _
    %p157 = scmp.le.s32.totalorder 1, %s9
    %p158 = scmp.lt.s32.totalorder %s9, 3
    %p159 = pnand %p157, %p158
    %p160 = pneg %p159
    // Predicated region
    $region29: #{tpu_custom_call.1} parent=5 // pred_check
      _
    $region30: #{tpu_custom_call.1} parent=5 // pred_check_branch
      %162 = sbr.rel (%p159) target = $region32
    $region31: #{tpu_custom_call.1} parent=5 // pred_region
      %s163 = ssub.s32 %s9, 1
      %s164 = smul.u32 2, %s19
      %p165 = scmp.lt.s32.totalorder %s18, 1
      %s166 = scalar_select %p165, %s18, 1
      %p167 = scmp.lt.s32.totalorder %s164, 1
      %s168 = scalar_select %p167, %s164, 1
      %s169 = smul.addr %s166, 2
      %s170 = sadd.s32 %s168, %s169
      %s171 = smul.addr %s170, 4
      %s172 = scalar_lea.vmem %s0, %s171
      %p173 = pneg %p49
      %p174 = pneg %p46
      %p175 = pneg %p70
      %p176 = pneg %p67
      %p177 = pneg %p91
      %p178 = pneg %p88
      %p179 = pneg %p119
      %p180 = pneg %p116
      %p181 = scmp.lt.s32.totalorder %s18, 1
      %s182 = scalar_select %p181, %s18, 1
      %p183 = scmp.lt.s32.totalorder %s19, 0
      %s184 = scalar_select %p183, %s19, 0
      %s185 = smul.addr %s182, 16
      %s186 = sadd.s32 %s184, %s185
      %s187 = smul.addr %s186, 8
      %s188 = scalar_lea.vmem %s3, %s187
      %s189 = smul.u32 2, %s19
      %p190 = scmp.lt.s32.totalorder %s18, 1
      %s191 = scalar_select %p190, %s18, 1
      %p192 = scmp.lt.s32.totalorder %s189, 1
      %s193 = scalar_select %p192, %s189, 1
      %s194 = smul.addr %s191, 2
      %s195 = sadd.s32 %s193, %s194
      %s196 = smul.addr %s195, 4
      %s197 = scalar_lea.vmem %s0, %s196
      %s198 = smul.u32 2, %s19
      %p199 = scmp.lt.s32.totalorder %s18, 1
      %s200 = scalar_select %p199, %s18, 1
      %p201 = scmp.lt.s32.totalorder %s19, 0
      %s202 = scalar_select %p201, %s19, 0
      %s203 = smul.addr %s200, 16
      %s204 = sadd.s32 %s202, %s203
      %s205 = smul.addr %s204, 8
      %s206 = scalar_lea.vmem %s3, %s205
      %v208 = vld [vmem:[%s1] sm:$0xf]
      %v209 = vld [vmem:[%s1 + $0x4] sm:$0xf]
      %v210 = vld [vmem:[%s1 + $0x8] sm:$0xf]
      %v211 = vld [vmem:[%s1 + $0xc] sm:$0xf]
      %v212 = vld [vmem:[%s1 + $0x10] sm:$0xf]
      %v213 = vld [vmem:[%s1 + $0x14] sm:$0xf]
      %v214 = vld [vmem:[%s1 + $0x18] sm:$0xf]
      %v215 = vld [vmem:[%s1 + $0x1c] sm:$0xf]
      %v216 = vld [vmem:[%s1 + $0x20] sm:$0xf]
      %v217 = vld [vmem:[%s1 + $0x24] sm:$0xf]
      %v218 = vld [vmem:[%s1 + $0x28] sm:$0xf]
      %v219 = vld [vmem:[%s1 + $0x2c] sm:$0xf]
      %v220 = vld [vmem:[%s1 + $0x30] sm:$0xf]
      %v221 = vld [vmem:[%s1 + $0x34] sm:$0xf]
      %v222 = vld [vmem:[%s1 + $0x38] sm:$0xf]
      %v223 = vld [vmem:[%s1 + $0x3c] sm:$0xf]
      %v224 = vld [vmem:[%s197] sm:$0xf]
      %v225 = vld [vmem:[%s197 + $0x4] sm:$0xf]
      %v226 = vld [vmem:[%s2] sm:$0xff]
      %v227 = vld [vmem:[%s2 + $0x8] sm:$0xff]
      %v228 = vld [vmem:[%s2 + $0x10] sm:$0xff]
      %v229 = vld [vmem:[%s2 + $0x18] sm:$0xff]
      %v230 = vld [vmem:[%s2 + $0x20] sm:$0xff]
      %v231 = vld [vmem:[%s2 + $0x28] sm:$0xff]
      %v232 = vld [vmem:[%s2 + $0x30] sm:$0xff]
      %v233 = vld [vmem:[%s2 + $0x38] sm:$0xff]
      %v234 = vld [vmem:[%s2 + $0x40] sm:$0xff]
      %v235 = vld [vmem:[%s2 + $0x48] sm:$0xff]
      %v236 = vld [vmem:[%s2 + $0x50] sm:$0xff]
      %v237 = vld [vmem:[%s2 + $0x58] sm:$0xff]
      %v238 = vld [vmem:[%s2 + $0x60] sm:$0xff]
      %v239 = vld [vmem:[%s2 + $0x68] sm:$0xff]
      %v240 = vld [vmem:[%s2 + $0x70] sm:$0xff]
      %v241 = vld [vmem:[%s2 + $0x78] sm:$0xff]
      %243 = vset.pattern.permute.xlu0 0
      %244 = vperm.xlu0 %243, %v226
      %v245 = vpop.permute.xlu0 %244
      %248 = vset.pattern.permute.xlu0 0
      %249 = vperm.xlu0 %248, %v227
      %v250 = vpop.permute.xlu0 %249
      %253 = vset.pattern.permute.xlu0 0
      %254 = vperm.xlu0 %253, %v228
      %v255 = vpop.permute.xlu0 %254
      %258 = vset.pattern.permute.xlu0 0
      %259 = vperm.xlu0 %258, %v229
      %v260 = vpop.permute.xlu0 %259
      %263 = vset.pattern.permute.xlu0 0
      %264 = vperm.xlu0 %263, %v230
      %v265 = vpop.permute.xlu0 %264
      %268 = vset.pattern.permute.xlu0 0
      %269 = vperm.xlu0 %268, %v231
      %v270 = vpop.permute.xlu0 %269
      %273 = vset.pattern.permute.xlu0 0
      %274 = vperm.xlu0 %273, %v232
      %v275 = vpop.permute.xlu0 %274
      %278 = vset.pattern.permute.xlu0 0
      %279 = vperm.xlu0 %278, %v233
      %v280 = vpop.permute.xlu0 %279
      %283 = vset.pattern.permute.xlu0 0
      %284 = vperm.xlu0 %283, %v234
      %v285 = vpop.permute.xlu0 %284
      %288 = vset.pattern.permute.xlu0 0
      %289 = vperm.xlu0 %288, %v235
      %v290 = vpop.permute.xlu0 %289
      %293 = vset.pattern.permute.xlu0 0
      %294 = vperm.xlu0 %293, %v236
      %v295 = vpop.permute.xlu0 %294
      %298 = vset.pattern.permute.xlu0 0
      %299 = vperm.xlu0 %298, %v237
      %v300 = vpop.permute.xlu0 %299
      %303 = vset.pattern.permute.xlu0 0
      %304 = vperm.xlu0 %303, %v238
      %v305 = vpop.permute.xlu0 %304
      %308 = vset.pattern.permute.xlu0 0
      %309 = vperm.xlu0 %308, %v239
      %v310 = vpop.permute.xlu0 %309
      %313 = vset.pattern.permute.xlu0 0
      %314 = vperm.xlu0 %313, %v240
      %v315 = vpop.permute.xlu0 %314
      %318 = vset.pattern.permute.xlu0 0
      %319 = vperm.xlu0 %318, %v241
      %v320 = vpop.permute.xlu0 %319
      %v338 = vunpack.c.l.b16 %v208
      %v339 = vunpack.c.l.b16 %v209
      %v340 = vunpack.c.l.b16 %v210
      %v341 = vunpack.c.l.b16 %v211
      %v342 = vunpack.c.l.b16 %v212
      %v343 = vunpack.c.l.b16 %v213
      %v344 = vunpack.c.l.b16 %v214
      %v345 = vunpack.c.l.b16 %v215
      %v346 = vunpack.c.l.b16 %v216
      %v347 = vunpack.c.l.b16 %v217
      %v348 = vunpack.c.l.b16 %v218
      %v349 = vunpack.c.l.b16 %v219
      %v350 = vunpack.c.l.b16 %v220
      %v351 = vunpack.c.l.b16 %v221
      %v352 = vunpack.c.l.b16 %v222
      %v353 = vunpack.c.l.b16 %v223
      %v354 = vpack.c.b16 %v339, %v338
      %v355 = vpack.c.b16 %v341, %v340
      %v356 = vpack.c.b16 %v343, %v342
      %v357 = vpack.c.b16 %v345, %v344
      %v358 = vpack.c.b16 %v347, %v346
      %v359 = vpack.c.b16 %v349, %v348
      %v360 = vpack.c.b16 %v351, %v350
      %v361 = vpack.c.b16 %v353, %v352
      %v364 = vunpack.c.l.b16 %v224
      %v365 = vunpack.c.l.b16 %v225
      %v366 = vpack.c.b16 %v365, %v364
      %vm367 = vcmask 261120
      %v369 = vsel %vm367, %v354, 0
      %v372 = vsel %vm367, %v355, 0
      %v375 = vsel %vm367, %v356, 0
      %v378 = vsel %vm367, %v357, 0
      %v381 = vsel %vm367, %v358, 0
      %v384 = vsel %vm367, %v359, 0
      %v387 = vsel %vm367, %v360, 0
      %v390 = vsel %vm367, %v361, 0
      %v393 = vsel %vm367, %v366, 0
      %395 = vmatprep.subr.bf16.mxu0 0
      %396 = vmatpush1.bf16.xpose.msra.mxu0 %v393
      %397 = vmatprep.subr.bf16.mxu0 0
      %398 = vmatpush1.bf16.xpose.msra.mxu0 0
      %399 = vmatprep.subr.bf16.mxu0 0
      %400 = vmatpush1.bf16.xpose.msra.mxu0 0
      %401 = vmatprep.subr.bf16.mxu0 0
      %402 = vmatpush1.bf16.xpose.msra.mxu0 0
      %403 = vmatprep.subr.bf16.mxu0 0
      %404 = vmatpush1.bf16.xpose.msra.mxu0 0
      %405 = vmatprep.subr.bf16.mxu0 0
      %406 = vmatpush1.bf16.xpose.msra.mxu0 0
      %407 = vmatprep.subr.bf16.mxu0 0
      %408 = vmatpush1.bf16.xpose.msra.mxu0 0
      %409 = vmatprep.subr.bf16.mxu0 0
      %410 = vmatpush1.bf16.xpose.msra.mxu0 0
      %411 = vmatprep.subr.bf16.mxu0 0
      %412 = vmatpush1.bf16.xpose.msra.mxu0 0
      %413 = vmatprep.subr.bf16.mxu0 0
      %414 = vmatpush1.bf16.xpose.msra.mxu0 0
      %415 = vmatprep.subr.bf16.mxu0 0
      %416 = vmatpush1.bf16.xpose.msra.mxu0 0
      %417 = vmatprep.subr.bf16.mxu0 0
      %418 = vmatpush1.bf16.xpose.msra.mxu0 0
      %419 = vmatprep.subr.bf16.mxu0 0
      %420 = vmatpush1.bf16.xpose.msra.mxu0 0
      %421 = vmatprep.subr.bf16.mxu0 0
      %422 = vmatpush1.bf16.xpose.msra.mxu0 0
      %423 = vmatprep.subr.bf16.mxu0 0
      %424 = vmatpush1.bf16.xpose.msra.mxu0 0
      %425 = vmatprep.subr.bf16.mxu0 0
      %426 = vmatpush1.bf16.xpose.msra.mxu0 0
      %427 = vmatprep.mubr.bf16.mxu0 0
      %428 = vmatmul.mubr.bf16.gmra.mrb[0].mxu0 %v369
      %v429 = vpop.f32.mrb[0].mxu0
      %v430 = vadd.f32 %v245, %v429
      %v431 = vpop.f32.mrb[0].mxu0
      %v432 = vpop.f32.mrb[0].mxu0
      %v433 = vadd.f32 %v250, %v432
      %v434 = vpop.f32.mrb[0].mxu0
      %435 = vmatprep.mubr.bf16.mxu0 0
      %436 = vmatmul.mubr.bf16.gmra.mrb[0].mxu0 %v372
      %v437 = vpop.f32.mrb[0].mxu0
      %v438 = vadd.f32 %v255, %v437
      %v439 = vpop.f32.mrb[0].mxu0
      %v440 = vpop.f32.mrb[0].mxu0
      %v441 = vadd.f32 %v260, %v440
      %v442 = vpop.f32.mrb[0].mxu0
      %443 = vmatprep.mubr.bf16.mxu0 0
      %444 = vmatmul.mubr.bf16.gmra.mrb[0].mxu0 %v375
      %v445 = vpop.f32.mrb[0].mxu0
      %v446 = vadd.f32 %v265, %v445
      %v447 = vpop.f32.mrb[0].mxu0
      %v448 = vpop.f32.mrb[0].mxu0
      %v449 = vadd.f32 %v270, %v448
      %v450 = vpop.f32.mrb[0].mxu0
      %451 = vmatprep.mubr.bf16.mxu0 0
      %452 = vmatmul.mubr.bf16.gmra.mrb[0].mxu0 %v378
      %v453 = vpop.f32.mrb[0].mxu0
      %v454 = vadd.f32 %v275, %v453
      %v455 = vpop.f32.mrb[0].mxu0
      %v456 = vpop.f32.mrb[0].mxu0
      %v457 = vadd.f32 %v280, %v456
      %v458 = vpop.f32.mrb[0].mxu0
      %459 = vmatprep.mubr.bf16.mxu0 0
      %460 = vmatmul.mubr.bf16.gmra.mrb[0].mxu0 %v381
      %v461 = vpop.f32.mrb[0].mxu0
      %v462 = vadd.f32 %v285, %v461
      %v463 = vpop.f32.mrb[0].mxu0
      %v464 = vpop.f32.mrb[0].mxu0
      %v465 = vadd.f32 %v290, %v464
      %v466 = vpop.f32.mrb[0].mxu0
      %467 = vmatprep.mubr.bf16.mxu0 0
      %468 = vmatmul.mubr.bf16.gmra.mrb[0].mxu0 %v384
      %v469 = vpop.f32.mrb[0].mxu0
      %v470 = vadd.f32 %v295, %v469
      %v471 = vpop.f32.mrb[0].mxu0
      %v472 = vpop.f32.mrb[0].mxu0
      %v473 = vadd.f32 %v300, %v472
      %v474 = vpop.f32.mrb[0].mxu0
      %475 = vmatprep.mubr.bf16.mxu0 0
      %476 = vmatmul.mubr.bf16.gmra.mrb[0].mxu0 %v387
      %v477 = vpop.f32.mrb[0].mxu0
      %v478 = vadd.f32 %v305, %v477
      %v479 = vpop.f32.mrb[0].mxu0
      %v480 = vpop.f32.mrb[0].mxu0
      %v481 = vadd.f32 %v310, %v480
      %v482 = vpop.f32.mrb[0].mxu0
      %483 = vmatprep.mubr.bf16.mxu0 0
      %484 = vmatmul.mubr.bf16.gmra.mrb[0].mxu0 %v390
      %v485 = vpop.f32.mrb[0].mxu0
      %v486 = vadd.f32 %v315, %v485
      %v487 = vpop.f32.mrb[0].mxu0
      %v488 = vpop.f32.mrb[0].mxu0
      %v489 = vadd.f32 %v320, %v488
      %v490 = vpop.f32.mrb[0].mxu0
      %491 = vdwg.mxu0
      %vm492 = vcmask 130048
      %493 = vst.msk [vmem:[%s206] sm:$0xff] %vm492, %v430
      %494 = vst.msk [vmem:[%s206 + $0x8] sm:$0xff] %vm492, %v433
      %495 = vst.msk [vmem:[%s206 + $0x10] sm:$0xff] %vm492, %v438
      %496 = vst.msk [vmem:[%s206 + $0x18] sm:$0xff] %vm492, %v441
      %497 = vst.msk [vmem:[%s206 + $0x20] sm:$0xff] %vm492, %v446
      %498 = vst.msk [vmem:[%s206 + $0x28] sm:$0xff] %vm492, %v449
      %499 = vst.msk [vmem:[%s206 + $0x30] sm:$0xff] %vm492, %v454
      %500 = vst.msk [vmem:[%s206 + $0x38] sm:$0xff] %vm492, %v457
      %501 = vst.msk [vmem:[%s206 + $0x40] sm:$0xff] %vm492, %v462
      %502 = vst.msk [vmem:[%s206 + $0x48] sm:$0xff] %vm492, %v465
      %503 = vst.msk [vmem:[%s206 + $0x50] sm:$0xff] %vm492, %v470
      %504 = vst.msk [vmem:[%s206 + $0x58] sm:$0xff] %vm492, %v473
      %505 = vst.msk [vmem:[%s206 + $0x60] sm:$0xff] %vm492, %v478
      %506 = vst.msk [vmem:[%s206 + $0x68] sm:$0xff] %vm492, %v481
      %507 = vst.msk [vmem:[%s206 + $0x70] sm:$0xff] %vm492, %v486
      %508 = vst.msk [vmem:[%s206 + $0x78] sm:$0xff] %vm492, %v489
      %p509 = scmp.lt.s32.totalorder %s18, 1
      %s510 = scalar_select %p509, %s18, 1
      %p511 = scmp.lt.s32.totalorder %s19, 0
      %s512 = scalar_select %p511, %s19, 0
      %s513 = smul.addr %s510, 16
      %s514 = sadd.s32 %s512, %s513
      %s515 = smul.addr %s514, 8
      %s516 = scalar_lea.vmem %s3, %s515
      // Predicated region
      $region33: #{tpu_custom_call.1} parent=31 // pred_check
        %p517 = pneg %p116
      $region34: #{tpu_custom_call.1} parent=31 // pred_check_branch
        %519 = sbr.rel (%p517) target = $region36
      $region35: #{tpu_custom_call.1} parent=31 // pred_region
        _
      $region36: #{tpu_custom_call.1} parent=31 // pred_fallthru
        _
    $region32: #{tpu_custom_call.1} parent=5 // pred_fallthru
      _
    %p520 = scmp.le.s32.totalorder 2, %s9
    // Predicated region
    $region37: #{tpu_custom_call.1} parent=5 // pred_check
      %p521 = pneg %p520
    $region38: #{tpu_custom_call.1} parent=5 // pred_check_branch
      %523 = sbr.rel (%p521) target = $region40
    $region39: #{tpu_custom_call.1} parent=5 // pred_region
      %s524 = ssub.s32 %s9, 2
      // Predicated region
      $region41: #{tpu_custom_call.1} parent=39 // pred_check
        %p525 = pneg %p122
      $region42: #{tpu_custom_call.1} parent=39 // pred_check_branch
        %527 = sbr.rel (%p525) target = $region44
      $region43: #{tpu_custom_call.1} parent=39 // pred_region
        %p528 = scmp.lt.s32.totalorder %s20, 1
        %s529 = scalar_select %p528, %s20, 1
        %p530 = scmp.lt.s32.totalorder %s21, 0
        %s531 = scalar_select %p530, %s21, 0
        %s532 = smul.addr %s529, 16
        %s533 = sadd.s32 %s531, %s532
        %s534 = smul.addr %s533, 8
        %s535 = scalar_lea.vmem %s3, %s534
      $region44: #{tpu_custom_call.1} parent=39 // pred_fallthru
        _
    $region40: #{tpu_custom_call.1} parent=5 // pred_fallthru
      _
  $region6: #{tpu_custom_call.1} parent=0 // loop_footer
    %s13 = sadd.s32 1, %s9
  $region7: #{tpu_custom_call.1} parent=0 // loop_footer_branch
    %8 = sbr.rel target = $region3
  $region8: #{tpu_custom_call.1} parent=0 // loop_exit
    _

</llo_original>
